<compile_context>
chip_gen: v6e
topology: v6e:2x2x1
jax: 0.10.0
libtpu: 0.0.40
codegen_flags: <defaults>
</compile_context>

<pallas_src>
import math
import functools

import jax
import jax.numpy as jnp
from jax.experimental import pallas as pl
from jax.experimental.pallas import tpu as pltpu


def build_pe(d_model, max_len=5000, dtype=jnp.float32):
    """Sinusoidal positional-encoding buffer, shape (max_len, 1, d_model)."""
    position = jnp.arange(max_len, dtype=jnp.float32)[:, None]              # (max_len, 1)
    div_term = jnp.exp(
        jnp.arange(0, d_model, 2, dtype=jnp.float32) * (-math.log(10000.0) / d_model)
    )                                                                        # (d_model//2,)
    angles = position * div_term                                             # (max_len, d_model//2)
    pe = jnp.zeros((max_len, d_model), dtype=jnp.float32)
    pe = pe.at[:, 0::2].set(jnp.sin(angles))
    pe = pe.at[:, 1::2].set(jnp.cos(angles))
    return pe[:, None, :].astype(dtype)                                      # (max_len, 1, d_model)


# ----------------------------- kernels -------------------------------------


def _pe_add_kernel(x_ref, pe_ref, o_ref):
    # x_ref: (tT, B, D), pe_ref: (tT, 1, D) -> broadcast add over batch.
    o_ref[...] = x_ref[...] + pe_ref[...]


def _pe_add_dropout_kernel(x_ref, pe_ref, u_ref, o_ref, *, p):
    # Inverted dropout: drop with prob p, scale survivors by 1/(1-p).
    y = x_ref[...] + pe_ref[...]
    inv_keep = 1.0 / max(1.0 - p, 1e-12)            # trace-time Python constant
    scale = jnp.where(u_ref[...] < p, 0.0, inv_keep).astype(y.dtype)
    o_ref[...] = y * scale                          # one vsel + one vmul


# ----------------------------- wrapper --------------------------------------


def _pick_block_rows(T, B, D, itemsize):
    """T-tile sized so one (rows, B, D) buffer is ~2 MiB (fits every chip's
    default scoped VMEM with 2x double-buffering of all streams)."""
    target_bytes = 2 * 1024 * 1024
    row_bytes = max(1, B * D * itemsize)
    rows = max(1, target_bytes // row_bytes)
    rows = min(rows, T)
    if rows >= 8:
        rows = (rows // 8) * 8                      # sublane-friendly
    return rows


def positional_encoding_forward(x, pe, *, p=0.2, training=False, rng_key=None,
                                block_rows=None):
    """x: (T, B, D); pe: (max_len, 1, D). Returns dropout(x + pe[:T])."""
    T, B, D = x.shape
    pe_slice = pe[:T].astype(x.dtype)               # (T, 1, D), add in x.dtype

    if block_rows is None:
        block_rows = _pick_block_rows(T, B, D, x.dtype.itemsize)
    block_rows = max(1, min(block_rows, T))
    grid = (pl.cdiv(T, block_rows),)

    x_spec = pl.BlockSpec((block_rows, B, D), lambda i: (i, 0, 0))
    pe_spec = pl.BlockSpec((block_rows, 1, D), lambda i: (i, 0, 0))
    out_spec = pl.BlockSpec((block_rows, B, D), lambda i: (i, 0, 0))
    out_shape = jax.ShapeDtypeStruct((T, B, D), x.dtype)
    cparams = pltpu.CompilerParams(dimension_semantics=("parallel",))

    apply_dropout = bool(training) and float(p) > 0.0
    if not apply_dropout:
        return pl.pallas_call(
            _pe_add_kernel,
            grid=grid,
            in_specs=[x_spec, pe_spec],
            out_specs=out_spec,
            out_shape=out_shape,
            compiler_params=cparams,
        )(x, pe_slice)

    if rng_key is None:
        rng_key = jax.random.PRNGKey(0)
    # Per-element uniforms drawn host/XLA-side; independent across tiles by
    # construction (no per-tile reseed correlation).
    u = jax.random.uniform(rng_key, (T, B, D), dtype=jnp.float32)
    u_spec = pl.BlockSpec((block_rows, B, D), lambda i: (i, 0, 0))
    kernel = functools.partial(_pe_add_dropout_kernel, p=float(p))
    return pl.pallas_call(
        kernel,
        grid=grid,
        in_specs=[x_spec, pe_spec, u_spec],
        out_specs=out_spec,
        out_shape=out_shape,
        compiler_params=cparams,
    )(x, pe_slice, u)


# ------------------------------- demo ---------------------------------------


if __name__ == "__main__":
    T, B, D = 16, 2, 128            # (T, B, D), lane-dense last dim
    key = jax.random.PRNGKey(0)
    kx, kdrop = jax.random.split(key)
    x = jax.random.normal(kx, (T, B, D), dtype=jnp.float32)
    pe = build_pe(D, max_len=64)

    # Eval mode (dropout is identity) — deterministic, check vs reference.
    # block_rows=8 forces a 2-step grid to exercise the tiled/pipelined path.
    y_eval = positional_encoding_forward(x, pe, p=0.2, training=False,
                                         block_rows=8)
    jax.block_until_ready(y_eval)
    ref = x + pe[:T]
    assert y_eval.shape == (T, B, D)
    assert jnp.allclose(y_eval, ref, atol=1e-6, rtol=1e-6), "eval mismatch"

    # Training mode — exercises the in-kernel dropout mask/scale path.
    p = 0.2
    y_train = positional_encoding_forward(x, pe, p=p, training=True,
                                          rng_key=kdrop, block_rows=8)
    jax.block_until_ready(y_train)
    assert y_train.shape == (T, B, D)
    # Reconstruct the exact expected output (same uniforms as the wrapper).
    u_ref = jax.random.uniform(kdrop, (T, B, D), dtype=jnp.float32)
    train_ref = jnp.where(u_ref < p, 0.0, ref * (1.0 / (1.0 - p)))
    assert jnp.allclose(y_train, train_ref.astype(x.dtype),
                        atol=1e-5, rtol=1e-5), "train mismatch"

    print("KERNEL_OK")
</pallas_src>

<mosaic_0001>
module attributes {stable_mosaic.version = 11 : i64} {
  func.func @_pe_add_kernel(%arg0: i32, %arg1: memref<8x2x128xf32, #tpu.memory_space<vmem>>, %arg2: memref<8x1x128xf32, #tpu.memory_space<vmem>>, %arg3: memref<8x2x128xf32, #tpu.memory_space<vmem>>) attributes {dimension_semantics = [#tpu.dimension_semantics<parallel>], iteration_bounds = array<i64: 2>, scalar_prefetch = 0 : i64, scratch_operands = 0 : i64, tpu.core_type = #tpu.core_type<tc>, window_params = [{transform_indices = @transform_0, window_bounds = array<i64: 8, 2, 128>}, {transform_indices = @transform_1, window_bounds = array<i64: 8, 1, 128>}, {transform_indices = @transform_2, window_bounds = array<i64: 8, 2, 128>}]} {
    %c0 = arith.constant 0 : index
    %c0_0 = arith.constant 0 : index
    %c0_1 = arith.constant 0 : index
    %0 = vector.load %arg1[%c0, %c0_0, %c0_1] : memref<8x2x128xf32, #tpu.memory_space<vmem>>, vector<8x2x128xf32>
    %c0_2 = arith.constant 0 : index
    %c0_3 = arith.constant 0 : index
    %c0_4 = arith.constant 0 : index
    %1 = vector.load %arg2[%c0_2, %c0_3, %c0_4] : memref<8x1x128xf32, #tpu.memory_space<vmem>>, vector<8x1x128xf32>
    %2 = vector.broadcast %1 : vector<8x1x128xf32> to vector<8x2x128xf32>
    %3 = arith.addf %0, %2 : vector<8x2x128xf32>
    %c0_5 = arith.constant 0 : index
    %c0_6 = arith.constant 0 : index
    %c0_7 = arith.constant 0 : index
    %4 = vector.load %arg3[%c0_5, %c0_6, %c0_7] : memref<8x2x128xf32, #tpu.memory_space<vmem>>, vector<8x2x128xf32>
    tpu.vector_store %arg3[%c0_5, %c0_6, %c0_7], %3 {strides = array<i32>} : memref<8x2x128xf32, #tpu.memory_space<vmem>>, vector<8x2x128xf32>,
    return
  }
  func.func @transform_0(%arg0: i32) -> (i32, i32, i32) {
    %c0_i32 = arith.constant 0 : i32
    %c0_i32_0 = arith.constant 0 : i32
    %c0_i32_1 = arith.constant 0 : i32
    return %arg0, %c0_i32, %c0_i32_0 : i32, i32, i32
  }
  func.func @transform_1(%arg0: i32) -> (i32, i32, i32) {
    %c0_i32 = arith.constant 0 : i32
    %c0_i32_0 = arith.constant 0 : i32
    %c0_i32_1 = arith.constant 0 : i32
    return %arg0, %c0_i32, %c0_i32_0 : i32, i32, i32
  }
  func.func @transform_2(%arg0: i32) -> (i32, i32, i32) {
    %c0_i32 = arith.constant 0 : i32
    %c0_i32_0 = arith.constant 0 : i32
    %c0_i32_1 = arith.constant 0 : i32
    return %arg0, %c0_i32, %c0_i32_0 : i32, i32, i32
  }
}

</mosaic_0001>

<llo_original>
// kernel: tpu_custom_call.1
$region0: #{tpu_custom_call.1}
  #allocation0 [shape = 'u32[]', space=smem, size = 0x4, offset = 0x4, fixed_abs, tag = 'smem constant byte address 0x4 - core index']
  #allocation1 [shape = 'u32[144,128]{1,0:T(1,128)}', space=vmem, size = 0x12000, scoped, tag = 'internal scratch']
  %s0 = inlined_call_operand.hbm [shape: f32[16,2,128], index: 0, kind: input, shape index: {}]
  %s1 = inlined_call_operand.hbm [shape: f32[16,1,128], index: 1, kind: input, shape index: {}]
  %s2 = inlined_call_operand.hbm [shape: f32[16,2,128], index: 2, kind: output, shape index: {}]
  %s3 = sld [smem:[#allocation0]]
  $region49: #{tpu_custom_call.1} parent=0
    _
  %s5 = ssub.s32 1, %s3
  %s6 = scalar_select 0, %s5, %s3
  $region1: #{tpu_custom_call.1} parent=0
    #allocation2 [shape = 'u8[16384]{0}', space=vmem, size = 0x4000, scoped, tag = 'input window, operand 0']
    #allocation3 [shape = 's32[2]{0}', space=sflag, size = 0x8, scoped, tag = 'scoped memory for tpu_custom_call.1']
    #allocation4 [shape = 's32[2]{0}', space=sflag, size = 0x8, scoped, tag = 'scoped memory for tpu_custom_call.1']
    #allocation5 [shape = 'u8[8192]{0}', space=vmem, size = 0x2000, scoped, tag = 'input window, operand 1']
    #allocation6 [shape = 's32[2]{0}', space=sflag, size = 0x8, scoped, tag = 'scoped memory for tpu_custom_call.1']
    #allocation7 [shape = 'u8[16384]{0}', space=vmem, size = 0x4000, scoped, tag = 'output window, operand 0']
    %7 = vsyncpa [#allocation3], 0
    %s8 = scalar_lea.sflag [#allocation3], 1
    %9 = vsyncpa %s8, 0
    %10 = vsyncpa [#allocation6], 0
    %s11 = scalar_lea.sflag [#allocation6], 1
    %12 = vsyncpa %s11, 0
    %13 = vsyncpa [#allocation4], 0
    %s14 = scalar_lea.sflag [#allocation4], 1
    %15 = vsyncpa %s14, 0
    loop: start=0, step=1, limit=4
    $region2: #{tpu_custom_call.1} parent=1 // loop_pre_header
      _
    $region3: #{tpu_custom_call.1} parent=1 // loop_header
      %s17 = sphi 0, %s21
      %p18 = scmp.ge.s32.totalorder %s17, 4
      %s27 = sphi 0, %s29
      %s30 = sphi 0, %s27
      %s31 = sphi 0, %s30
      %s47 = sphi 0, %s31
      %s53 = sphi 0, %s55
      %s56 = sphi 0, %s53
      %s57 = sphi 0, %s56
      %s73 = sphi 0, %s57
      %s79 = sphi 0, %s81
      %s82 = sphi 0, %s79
      %s83 = sphi 0, %s82
      %s99 = sphi 0, %s83
    $region4: #{tpu_custom_call.1} parent=1 // loop_header_branch
      %20 = sbr.rel (%p18) target = $region8
    $region5: #{tpu_custom_call.1} parent=1 // loop_body
      %s22 = ssub.s32 %s17, 1
      %s23 = ssub.s32 %s17, 2
      %s24 = sadd.s32 %s17, 1
      %s25 = ssub.s32 %s17, %s24
      %p26 = scmp.eq.s32.totalorder %s25, 0
      %s28 = sadd.s32 %s27, 1
      %s29 = scalar_select %p26, %s27, %s28
      %p32 = pneg %p26
      %p33 = scmp.eq.s32.totalorder %s17, 1
      %p34 = por %p32, %p33
      %p35 = scmp.ne.s32.totalorder %s27, %s30
      %p36 = scmp.eq.s32.totalorder %s17, 0
      %p37 = por %p35, %p36
      %p38 = scmp.ne.s32.totalorder %s27, %s30
      %p39 = scmp.eq.s32.totalorder %s22, 1
      %p40 = por %p38, %p39
      %p41 = scmp.ne.s32.totalorder %s30, %s31
      %p42 = scmp.eq.s32.totalorder %s22, 0
      %p43 = por %p41, %p42
      %p44 = scmp.ne.s32.totalorder %s30, %s31
      %p45 = scmp.eq.s32.totalorder %s23, 1
      %p46 = por %p44, %p45
      %p48 = scmp.ne.s32.totalorder %s31, %s47
      %p49 = scmp.eq.s32.totalorder %s23, 0
      %p50 = por %p48, %p49
      %s51 = ssub.s32 %s17, %s24
      %p52 = scmp.eq.s32.totalorder %s51, 0
      %s54 = sadd.s32 %s53, 1
      %s55 = scalar_select %p52, %s53, %s54
      %p58 = pneg %p52
      %p59 = scmp.eq.s32.totalorder %s17, 1
      %p60 = por %p58, %p59
      %p61 = scmp.ne.s32.totalorder %s53, %s56
      %p62 = scmp.eq.s32.totalorder %s17, 0
      %p63 = por %p61, %p62
      %p64 = scmp.ne.s32.totalorder %s53, %s56
      %p65 = scmp.eq.s32.totalorder %s22, 1
      %p66 = por %p64, %p65
      %p67 = scmp.ne.s32.totalorder %s56, %s57
      %p68 = scmp.eq.s32.totalorder %s22, 0
      %p69 = por %p67, %p68
      %p70 = scmp.ne.s32.totalorder %s56, %s57
      %p71 = scmp.eq.s32.totalorder %s23, 1
      %p72 = por %p70, %p71
      %p74 = scmp.ne.s32.totalorder %s57, %s73
      %p75 = scmp.eq.s32.totalorder %s23, 0
      %p76 = por %p74, %p75
      %s77 = ssub.s32 %s17, %s24
      %p78 = scmp.eq.s32.totalorder %s77, 0
      %s80 = sadd.s32 %s79, 1
      %s81 = scalar_select %p78, %s79, %s80
      %p84 = pneg %p78
      %p85 = scmp.eq.s32.totalorder %s17, 1
      %p86 = por %p84, %p85
      %p87 = scmp.ne.s32.totalorder %s79, %s82
      %p88 = scmp.eq.s32.totalorder %s17, 0
      %p89 = por %p87, %p88
      %p90 = scmp.ne.s32.totalorder %s79, %s82
      %p91 = scmp.eq.s32.totalorder %s22, 1
      %p92 = por %p90, %p91
      %p93 = scmp.ne.s32.totalorder %s82, %s83
      %p94 = scmp.eq.s32.totalorder %s22, 0
      %p95 = por %p93, %p94
      %p96 = scmp.ne.s32.totalorder %s82, %s83
      %p97 = scmp.eq.s32.totalorder %s23, 1
      %p98 = por %p96, %p97
      %p100 = scmp.ne.s32.totalorder %s83, %s99
      %p101 = scmp.eq.s32.totalorder %s23, 0
      %p102 = por %p100, %p101
      %p103 = scmp.le.s32.totalorder 1, %s17
      %p104 = scmp.lt.s32.totalorder %s17, 3
      %p105 = pnand %p103, %p104
      %p106 = pneg %p105
      // Predicated region
      $region9: #{tpu_custom_call.1} parent=5 // pred_check
        _
      $region10: #{tpu_custom_call.1} parent=5 // pred_check_branch
        %108 = sbr.rel (%p105) target = $region12
      $region11: #{tpu_custom_call.1} parent=5 // pred_region
        %s109 = ssub.s32 %s17, 1
      $region12: #{tpu_custom_call.1} parent=5 // pred_fallthru
        _
      %p110 = scmp.lt.s32.totalorder %s17, 2
      // Predicated region
      $region13: #{tpu_custom_call.1} parent=5 // pred_check
        %p111 = pneg %p110
      $region14: #{tpu_custom_call.1} parent=5 // pred_check_branch
        %113 = sbr.rel (%p111) target = $region16
      $region15: #{tpu_custom_call.1} parent=5 // pred_region
        // Predicated region
        $region17: #{tpu_custom_call.1} parent=15 // pred_check
          %p114 = pneg %p37
        $region18: #{tpu_custom_call.1} parent=15 // pred_check_branch
          %116 = sbr.rel (%p114) target = $region20
        $region19: #{tpu_custom_call.1} parent=15 // pred_region
          %s117 = sand.u32 %s27, 1
          %s118 = scalar_lea.sflag [#allocation3], %s117
          %s119 = sand.u32 %s27, 1
          %s120 = smul.addr %s119, 16
          %s121 = scalar_lea.vmem [#allocation2], %s120
          %s122 = smul.u32 8, %s17
          %s124 = ssub.s32 256, 256
          %125 = vsyncadd %s118, %s124
          %s126 = smul.addr %s122, 32
          %s127 = scalar_lea.hbm %s0, %s126
          %s128 = sshll.u32 %s121, 4
          %s129 = int_to_ptr.vmem [resolvable:$true] %s128
          %134 = dma.hbm_to_vmem [thread:$0]  %s127, 256, %s129, %s118, 32, 32, 2
        $region20: #{tpu_custom_call.1} parent=15 // pred_fallthru
          _
        // Predicated region
        $region21: #{tpu_custom_call.1} parent=15 // pred_check
          %p135 = pneg %p63
        $region22: #{tpu_custom_call.1} parent=15 // pred_check_branch
          %137 = sbr.rel (%p135) target = $region24
        $region23: #{tpu_custom_call.1} parent=15 // pred_region
          %s138 = sand.u32 %s53, 1
          %s139 = scalar_lea.sflag [#allocation6], %s138
          %s140 = sand.u32 %s53, 1
          %s141 = smul.addr %s140, 8
          %s142 = scalar_lea.vmem [#allocation5], %s141
          %s143 = smul.u32 8, %s17
          %s145 = ssub.s32 128, 128
          %146 = vsyncadd %s139, %s145
          %s147 = smul.addr %s143, 16
          %s148 = scalar_lea.hbm %s1, %s147
          %s149 = sshll.u32 %s142, 4
          %s150 = int_to_ptr.vmem [resolvable:$true] %s149
          %155 = dma.hbm_to_vmem [thread:$0]  %s148, 128, %s150, %s139, 16, 16, 1
        $region24: #{tpu_custom_call.1} parent=15 // pred_fallthru
          _
      $region16: #{tpu_custom_call.1} parent=5 // pred_fallthru
        _
      %p156 = scmp.le.s32.totalorder 1, %s17
      %p157 = scmp.lt.s32.totalorder %s17, 3
      %p158 = pnand %p156, %p157
      %p159 = pneg %p158
      // Predicated region
      $region25: #{tpu_custom_call.1} parent=5 // pred_check
        _
      $region26: #{tpu_custom_call.1} parent=5 // pred_check_branch
        %161 = sbr.rel (%p158) target = $region28
      $region27: #{tpu_custom_call.1} parent=5 // pred_region
        %s162 = ssub.s32 %s17, 1
        %s163 = sand.u32 %s30, 1
        %s164 = scalar_lea.sflag [#allocation3], %s163
        %s165 = sand.u32 %s30, 1
        %s166 = smul.addr %s165, 16
        %s167 = scalar_lea.vmem [#allocation2], %s166
        // Predicated region
        $region29: #{tpu_custom_call.1} parent=27 // pred_check
          %p168 = pneg %p43
        $region30: #{tpu_custom_call.1} parent=27 // pred_check_branch
          %170 = sbr.rel (%p168) target = $region32
        $region31: #{tpu_custom_call.1} parent=27 // pred_region
          %171 = dma.done %s164, 256
        $region32: #{tpu_custom_call.1} parent=27 // pred_fallthru
          _
        %s172 = sand.u32 %s56, 1
        %s173 = scalar_lea.sflag [#allocation6], %s172
        %s174 = sand.u32 %s56, 1
        %s175 = smul.addr %s174, 8
        %s176 = scalar_lea.vmem [#allocation5], %s175
        // Predicated region
        $region33: #{tpu_custom_call.1} parent=27 // pred_check
          %p177 = pneg %p69
        $region34: #{tpu_custom_call.1} parent=27 // pred_check_branch
          %179 = sbr.rel (%p177) target = $region36
        $region35: #{tpu_custom_call.1} parent=27 // pred_region
          %180 = dma.done %s173, 128
        $region36: #{tpu_custom_call.1} parent=27 // pred_fallthru
          _
        %s181 = sand.u32 %s30, 1
        %s182 = scalar_lea.sflag [#allocation3], %s181
        %s183 = sand.u32 %s30, 1
        %s184 = smul.addr %s183, 16
        %s185 = scalar_lea.vmem [#allocation2], %s184
        %p186 = pneg %p43
        %p187 = pneg %p40
        %s188 = sand.u32 %s56, 1
        %s189 = scalar_lea.sflag [#allocation6], %s188
        %s190 = sand.u32 %s56, 1
        %s191 = smul.addr %s190, 8
        %s192 = scalar_lea.vmem [#allocation5], %s191
        %p193 = pneg %p69
        %p194 = pneg %p66
        %p195 = pneg %p95
        %p196 = pneg %p92
        %s197 = sand.u32 %s82, 1
        %s198 = scalar_lea.sflag [#allocation4], %s197
        %s199 = sand.u32 %s82, 1
        %s200 = smul.addr %s199, 16
        %s201 = scalar_lea.vmem [#allocation7], %s200
        %s202 = smul.u32 8, %s22
        %s203 = smul.u32 8, %s22
        %s204 = smul.u32 8, %s22
        %v205 = vld [vmem:[%s167] sm:$0x3]
        %v206 = vld [vmem:[%s167 + $0x2] sm:$0x3]
        %v207 = vld [vmem:[%s167 + $0x4] sm:$0x3]
        %v208 = vld [vmem:[%s167 + $0x6] sm:$0x3]
        %v209 = vld [vmem:[%s167 + $0x8] sm:$0x3]
        %v210 = vld [vmem:[%s167 + $0xa] sm:$0x3]
        %v211 = vld [vmem:[%s167 + $0xc] sm:$0x3]
        %v212 = vld [vmem:[%s167 + $0xe] sm:$0x3]
        %v213 = vld [vmem:[%s176] sm:$0x1]
        %v214 = vld [vmem:[%s176 + $0x1] sm:$0x1]
        %v215 = vld [vmem:[%s176 + $0x2] sm:$0x1]
        %v216 = vld [vmem:[%s176 + $0x3] sm:$0x1]
        %v217 = vld [vmem:[%s176 + $0x4] sm:$0x1]
        %v218 = vld [vmem:[%s176 + $0x5] sm:$0x1]
        %v219 = vld [vmem:[%s176 + $0x6] sm:$0x1]
        %v220 = vld [vmem:[%s176 + $0x7] sm:$0x1]
        %v229 = vlaneseq
        %v230 = vshrl.u32 %v229, 7
        %v231 = vsub.s32 0, %v230
        %v232 = vrot.slane %v213, %v231
        %v233 = vlaneseq
        %v234 = vshrl.u32 %v233, 7
        %v235 = vsub.s32 0, %v234
        %v236 = vrot.slane %v214, %v235
        %v237 = vlaneseq
        %v238 = vshrl.u32 %v237, 7
        %v239 = vsub.s32 0, %v238
        %v240 = vrot.slane %v215, %v239
        %v241 = vlaneseq
        %v242 = vshrl.u32 %v241, 7
        %v243 = vsub.s32 0, %v242
        %v244 = vrot.slane %v216, %v243
        %v245 = vlaneseq
        %v246 = vshrl.u32 %v245, 7
        %v247 = vsub.s32 0, %v246
        %v248 = vrot.slane %v217, %v247
        %v249 = vlaneseq
        %v250 = vshrl.u32 %v249, 7
        %v251 = vsub.s32 0, %v250
        %v252 = vrot.slane %v218, %v251
        %v253 = vlaneseq
        %v254 = vshrl.u32 %v253, 7
        %v255 = vsub.s32 0, %v254
        %v256 = vrot.slane %v219, %v255
        %v257 = vlaneseq
        %v258 = vshrl.u32 %v257, 7
        %v259 = vsub.s32 0, %v258
        %v260 = vrot.slane %v220, %v259
        %v269 = vadd.f32 %v205, %v232
        %v270 = vadd.f32 %v206, %v236
        %v271 = vadd.f32 %v207, %v240
        %v272 = vadd.f32 %v208, %v244
        %v273 = vadd.f32 %v209, %v248
        %v274 = vadd.f32 %v210, %v252
        %v275 = vadd.f32 %v211, %v256
        %v276 = vadd.f32 %v212, %v260
        %277 = vst [vmem:[%s201] sm:$0x3] %v269
        %278 = vst [vmem:[%s201 + $0x2] sm:$0x3] %v270
        %279 = vst [vmem:[%s201 + $0x4] sm:$0x3] %v271
        %280 = vst [vmem:[%s201 + $0x6] sm:$0x3] %v272
        %281 = vst [vmem:[%s201 + $0x8] sm:$0x3] %v273
        %282 = vst [vmem:[%s201 + $0xa] sm:$0x3] %v274
        %283 = vst [vmem:[%s201 + $0xc] sm:$0x3] %v275
        %284 = vst [vmem:[%s201 + $0xe] sm:$0x3] %v276
        %s285 = sand.u32 %s82, 1
        %s286 = scalar_lea.sflag [#allocation4], %s285
        %s287 = sand.u32 %s82, 1
        %s288 = smul.addr %s287, 16
        %s289 = scalar_lea.vmem [#allocation7], %s288
        // Predicated region
        $region37: #{tpu_custom_call.1} parent=27 // pred_check
          %p290 = pneg %p92
        $region38: #{tpu_custom_call.1} parent=27 // pred_check_branch
          %292 = sbr.rel (%p290) target = $region40
        $region39: #{tpu_custom_call.1} parent=27 // pred_region
          %s293 = smul.u32 8, %s22
          %s295 = ssub.s32 256, 256
          %296 = vsyncadd %s286, %s295
          %s297 = smul.addr %s293, 32
          %s298 = scalar_lea.hbm %s2, %s297
          %s299 = sshll.u32 %s289, 4
          %s300 = int_to_ptr.vmem [resolvable:$true] %s299
          %305 = dma.vmem_to_hbm [thread:$0]  %s300, 256, %s298, %s286, 32, 32, 2
        $region40: #{tpu_custom_call.1} parent=27 // pred_fallthru
          _
      $region28: #{tpu_custom_call.1} parent=5 // pred_fallthru
        _
      %p306 = scmp.le.s32.totalorder 2, %s17
      // Predicated region
      $region41: #{tpu_custom_call.1} parent=5 // pred_check
        %p307 = pneg %p306
      $region42: #{tpu_custom_call.1} parent=5 // pred_check_branch
        %309 = sbr.rel (%p307) target = $region44
      $region43: #{tpu_custom_call.1} parent=5 // pred_region
        %s310 = ssub.s32 %s17, 2
        // Predicated region
        $region45: #{tpu_custom_call.1} parent=43 // pred_check
          %p311 = pneg %p98
        $region46: #{tpu_custom_call.1} parent=43 // pred_check_branch
          %313 = sbr.rel (%p311) target = $region48
        $region47: #{tpu_custom_call.1} parent=43 // pred_region
          %s314 = sand.u32 %s83, 1
          %s315 = scalar_lea.sflag [#allocation4], %s314
          %s316 = sand.u32 %s83, 1
          %s317 = smul.addr %s316, 16
          %s318 = scalar_lea.vmem [#allocation7], %s317
          %319 = dma.done %s315, 256
        $region48: #{tpu_custom_call.1} parent=43 // pred_fallthru
          _
      $region44: #{tpu_custom_call.1} parent=5 // pred_fallthru
        _
    $region6: #{tpu_custom_call.1} parent=1 // loop_footer
      %s21 = sadd.s32 1, %s17
    $region7: #{tpu_custom_call.1} parent=1 // loop_footer_branch
      %16 = sbr.rel target = $region3
    $region8: #{tpu_custom_call.1} parent=1 // loop_exit
      _
    %320 = vsyncpa [#allocation3], 1
    %s321 = scalar_lea.sflag [#allocation3], 1
    %322 = vsyncpa %s321, 1
    %323 = vsyncpa [#allocation6], 1
    %s324 = scalar_lea.sflag [#allocation6], 1
    %325 = vsyncpa %s324, 1
    %326 = vsyncpa [#allocation4], 1
    %s327 = scalar_lea.sflag [#allocation4], 1
    %328 = vsyncpa %s327, 1

</llo_original>
